<compile_context>
chip_gen: v5e
topology: v5e:2x2
jax: 0.10.0
libtpu: 0.0.40
codegen_flags: <defaults>
</compile_context>

<pallas_src>
import functools

import jax
import jax.numpy as jnp
from jax.experimental import pallas as pl
from jax.experimental.pallas import tpu as pltpu


def _round_up(x, m):
    return ((x + m - 1) // m) * m


def _pick_tile(n, max_tile):
    """Adaptive batch tile.

    * n <= 128: round up to a multiple of 8 (f32 sublane tiling) -- no 64x
      padding waste for inference-sized batches.
    * larger n: at least 2 grid steps (so both v7x TensorCores are used),
      capped at `max_tile` so per-grid-step overhead stays amortized.
    """
    if n <= 128:
        return max(8, _round_up(n, 8))
    return int(min(max_tile, _round_up(-(-n // 2), 128)))


def _pick_chunk(tm):
    """Row-chunk used inside the kernel for MXU/EUP interleave."""
    for c in (256, 128):
        if tm % c == 0:
            return c
    return tm


def default_kernel_flags():
    """Pick unit placement per TPU generation (see perf notes above)."""
    try:
        kind = jax.devices()[0].device_kind.lower()
    except Exception:  # pragma: no cover - default to the newer-gen path
        kind = ""
    old_gen = any(tag in kind for tag in ("v2", "v3", "v4", "v5"))
    # v6e/v7x: VALU-bound -> layer 1 on the MXU, bf16 tanh on the EUP.
    # v5e and older: MXU-bound, no bf16 VPU/EUP -> keep layer 1 on the VPU, f32 tanh.
    return dict(layer1_on_mxu=not old_gen, bf16_acts=not old_gen)


def _mlp_kernel(x_ref, w1_ref, b1_ref, w2_ref, b2_ref, w3_ref, b3_ref, o_ref,
                *, chunk, layer1_on_mxu, bf16_acts):
    """Fused 4 -> 384 -> 384 -> 1 MLP over one batch tile of `tm` rows."""
    tm = x_ref.shape[0]
    n_chunks = tm // chunk

    # Weights / biases are small and shared across chunks (and, via constant
    # index_maps, across grid steps) -- load once per tile.
    w1 = w1_ref[...]            # (4, 384)   bf16 (MXU path) or f32 (VPU path)
    b1 = b1_ref[...]            # (1, 384)   f32
    w2 = w2_ref[...]            # (384, 384) bf16
    b2 = b2_ref[...]            # (1, 384)   f32
    w3 = w3_ref[...]            # (1, 384)   f32  (PyTorch layer-3 weight row)
    b3 = b3_ref[...]            # (1, 1)     f32

    def chunk_body(j, carry):
        lo = pl.multiple_of(j * chunk, chunk)
        x = x_ref[pl.ds(lo, chunk), :]                       # (chunk, 4) f32

        # ---- Layer 1 (4 -> 384).
        if layer1_on_mxu:
            # v6e/v7x: the MXU has >=3x slack here; a padded-K matmul costs
            # ~0.2 ns/row vs ~0.8 ns/row of broadcast-FMAs on the VALU slots.
            pre1 = jnp.dot(x.astype(jnp.bfloat16), w1,
                           preferred_element_type=jnp.float32) + b1
        else:
            # v5e: layer 2 on the MXU is the binder -- keep layer 1 on the VPU.
            pre1 = (x[:, 0:1] * w1[0:1, :]
                    + x[:, 1:2] * w1[1:2, :]
                    + x[:, 2:3] * w1[2:3, :]
                    + x[:, 3:4] * w1[3:4, :]
                    + b1)                                     # (chunk, 384) f32

        if bf16_acts:
            # bf16 EUP tanh (~2x f32 rate on v6e/v7x); h1 must be bf16 for the
            # MXU anyway, so this also removes a cast.
            h1 = jnp.tanh(pre1.astype(jnp.bfloat16))
        else:
            h1 = jnp.tanh(pre1).astype(jnp.bfloat16)

        # ---- Layer 2 (384 -> 384) on the MXU: bf16 x bf16 -> f32 accumulation.
        pre2 = jnp.dot(h1, w2, preferred_element_type=jnp.float32) + b2
        if bf16_acts:
            h2 = jnp.tanh(pre2.astype(jnp.bfloat16)).astype(jnp.float32)
        else:
            h2 = jnp.tanh(pre2)                               # (chunk, 384) f32

        # ---- Layer 3 (384 -> 1): VPU multiply + XLU lane reduction; an N=1
        # matmul would waste MXU padding on every generation.
        out = jnp.sum(h2 * w3, axis=-1, keepdims=True) + b3   # (chunk, 1) f32
        o_ref[pl.ds(lo, chunk), :] = out.astype(o_ref.dtype)
        return carry

    # Bounded inner loop (<=8 iterations) instead of a long fully-unrolled
    # Python loop: keeps LLO scheduler visibility with bounded vreg pressure,
    # and the pl.multiple_of-aligned dynamic stores stay unmasked.
    jax.lax.fori_loop(0, n_chunks, chunk_body, 0, unroll=True)


@functools.partial(jax.jit,
                   static_argnames=("layer1_on_mxu", "bf16_acts", "max_tile"))
def kinetic_energy_net_forward(state, kparams, *, layer1_on_mxu=True,
                               bf16_acts=True, max_tile=2048):
    """state: [N, 4] float32 -> [N, 1] float32 (same semantics as the PyTorch net)."""
    w1, b1, w2, b2, w3, b3 = kparams
    n, d_in = state.shape
    if d_in != 4:
        raise ValueError(f"expected 4 input features, got {d_in}")
    hidden = w1.shape[1]

    tm = _pick_tile(n, max_tile)
    chunk = _pick_chunk(tm)

    # Pad the batch to a multiple of the tile size (padded rows are discarded).
    n_pad = _round_up(n, tm)
    if n_pad != n:
        state = jnp.pad(state, ((0, n_pad - n), (0, 0)))

    grid = (n_pad // tm,)

    out = pl.pallas_call(
        functools.partial(_mlp_kernel, chunk=chunk,
                          layer1_on_mxu=layer1_on_mxu, bf16_acts=bf16_acts),
        out_shape=jax.ShapeDtypeStruct((n_pad, 1), jnp.float32),
        grid_spec=pltpu.PrefetchScalarGridSpec(
            num_scalar_prefetch=0,
            grid=grid,
            in_specs=[
                pl.BlockSpec((tm, 4), lambda i: (i, 0)),              # x tile
                pl.BlockSpec((4, hidden), lambda i: (0, 0)),          # W1 [in, out]
                pl.BlockSpec((1, hidden), lambda i: (0, 0)),          # b1
                pl.BlockSpec((hidden, hidden), lambda i: (0, 0)),     # W2 [in, out] bf16
                pl.BlockSpec((1, hidden), lambda i: (0, 0)),          # b2
                pl.BlockSpec((1, hidden), lambda i: (0, 0)),          # W3 row
                pl.BlockSpec((1, 1), lambda i: (0, 0)),               # b3
            ],
            out_specs=pl.BlockSpec((tm, 1), lambda i: (i, 0)),
        ),
        compiler_params=pltpu.CompilerParams(
            # Batch tiles are independent -> megacore/second-TC shardable.
            dimension_semantics=("parallel",),
        ),
    )(state, w1, b1, w2, b2, w3, b3)

    return out[:n]


def init_params(key):
    """Deterministic init matching the PyTorch module:
    weights ~ Normal(0, 0.1), biases = 0. W1/W2 stored as [in, out], W3 as (1, 384)."""
    k1, k2, k3 = jax.random.split(key, 3)
    w1 = jax.random.normal(k1, (4, 384), jnp.float32) * 0.1
    b1 = jnp.zeros((1, 384), jnp.float32)
    w2 = jax.random.normal(k2, (384, 384), jnp.float32) * 0.1
    b2 = jnp.zeros((1, 384), jnp.float32)
    w3 = jax.random.normal(k3, (1, 384), jnp.float32) * 0.1
    b3 = jnp.zeros((1, 1), jnp.float32)
    return (w1, b1, w2, b2, w3, b3)


def prepare_params(params, *, layer1_on_mxu=True):
    """One-time dtype conversion so no cast / extra HBM round-trip happens per call."""
    w1, b1, w2, b2, w3, b3 = params
    w1_k = w1.astype(jnp.bfloat16 if layer1_on_mxu else jnp.float32)
    return (w1_k,
            b1.astype(jnp.float32),
            w2.astype(jnp.bfloat16),
            b2.astype(jnp.float32),
            w3.astype(jnp.float32),
            b3.astype(jnp.float32))


def reference_forward(state, params):
    w1, b1, w2, b2, w3, b3 = params
    h1 = jnp.tanh(state @ w1 + b1)
    h2 = jnp.tanh(h1 @ w2 + b2)
    return h2 @ w3.T + b3


if __name__ == "__main__":
    key = jax.random.PRNGKey(0)
    pkey, xkey, xkey2 = jax.random.split(key, 3)

    params = init_params(pkey)
    flags = default_kernel_flags()
    kparams = prepare_params(params, layer1_on_mxu=flags["layer1_on_mxu"])

    # Small inference-sized batch (adaptive tile -> no 64x padding waste).
    state = jax.random.normal(xkey, (8, 4), jnp.float32)
    out = kinetic_energy_net_forward(state, kparams, **flags)
    out = jax.block_until_ready(out)

    ref = reference_forward(state, params)
    assert out.shape == (8, 1)
    assert jnp.allclose(out, ref, atol=3e-2, rtol=3e-2), (
        f"max abs err {jnp.max(jnp.abs(out - ref))}")

    # Medium batch exercising the multi-tile grid, chunked fori_loop and padding.
    state2 = jax.random.normal(xkey2, (1000, 4), jnp.float32)
    out2 = kinetic_energy_net_forward(state2, kparams, **flags)
    out2 = jax.block_until_ready(out2)
    ref2 = reference_forward(state2, params)
    assert out2.shape == (1000, 1)
    assert jnp.allclose(out2, ref2, atol=3e-2, rtol=3e-2), (
        f"max abs err {jnp.max(jnp.abs(out2 - ref2))}")

    print("KERNEL_OK")
</pallas_src>

<mosaic_0001>
module attributes {stable_mosaic.version = 11 : i64} {
  func.func @_mlp_kernel(%arg0: i32, %arg1: memref<8x4xf32, #tpu.memory_space<vmem>>, %arg2: memref<4x384xbf16, #tpu.memory_space<vmem>>, %arg3: memref<1x384xf32, #tpu.memory_space<vmem>>, %arg4: memref<384x384xbf16, #tpu.memory_space<vmem>>, %arg5: memref<1x384xf32, #tpu.memory_space<vmem>>, %arg6: memref<1x384xf32, #tpu.memory_space<vmem>>, %arg7: memref<1x1xf32, #tpu.memory_space<vmem>>, %arg8: memref<8x1xf32, #tpu.memory_space<vmem>>) attributes {dimension_semantics = [#tpu.dimension_semantics<parallel>], iteration_bounds = array<i64: 1>, scalar_prefetch = 0 : i64, scratch_operands = 0 : i64, tpu.core_type = #tpu.core_type<tc>, window_params = [{transform_indices = @transform_0, window_bounds = array<i64: 8, 4>}, {pipeline_mode = #tpu.pipeline_mode<synchronous>, transform_indices = @transform_1, window_bounds = array<i64: 4, 384>}, {pipeline_mode = #tpu.pipeline_mode<synchronous>, transform_indices = @transform_2, window_bounds = array<i64: 1, 384>}, {pipeline_mode = #tpu.pipeline_mode<synchronous>, transform_indices = @transform_3, window_bounds = array<i64: 384, 384>}, {pipeline_mode = #tpu.pipeline_mode<synchronous>, transform_indices = @transform_4, window_bounds = array<i64: 1, 384>}, {pipeline_mode = #tpu.pipeline_mode<synchronous>, transform_indices = @transform_5, window_bounds = array<i64: 1, 384>}, {pipeline_mode = #tpu.pipeline_mode<synchronous>, transform_indices = @transform_6, window_bounds = array<i64: 1, 1>}, {transform_indices = @transform_7, window_bounds = array<i64: 8, 1>}]} {
    %c0 = arith.constant 0 : index
    %c0_0 = arith.constant 0 : index
    %0 = vector.load %arg2[%c0, %c0_0] : memref<4x384xbf16, #tpu.memory_space<vmem>>, vector<4x384xbf16>
    %c0_1 = arith.constant 0 : index
    %c0_2 = arith.constant 0 : index
    %1 = vector.load %arg3[%c0_1, %c0_2] : memref<1x384xf32, #tpu.memory_space<vmem>>, vector<1x384xf32>
    %c0_3 = arith.constant 0 : index
    %c0_4 = arith.constant 0 : index
    %2 = vector.load %arg4[%c0_3, %c0_4] : memref<384x384xbf16, #tpu.memory_space<vmem>>, vector<384x384xbf16>
    %c0_5 = arith.constant 0 : index
    %c0_6 = arith.constant 0 : index
    %3 = vector.load %arg5[%c0_5, %c0_6] : memref<1x384xf32, #tpu.memory_space<vmem>>, vector<1x384xf32>
    %c0_7 = arith.constant 0 : index
    %c0_8 = arith.constant 0 : index
    %4 = vector.load %arg6[%c0_7, %c0_8] : memref<1x384xf32, #tpu.memory_space<vmem>>, vector<1x384xf32>
    %c0_9 = arith.constant 0 : index
    %c0_10 = arith.constant 0 : index
    %5 = vector.load %arg7[%c0_9, %c0_10] : memref<1x1xf32, #tpu.memory_space<vmem>>, vector<1x1xf32>
    %c0_i32 = arith.constant 0 : i32
    %c8_i32 = arith.constant 8 : i32
    %6 = arith.muli %c0_i32, %c8_i32 : i32
    %7 = tpu.assume_multiple %6, 8 : i32
    %8 = arith.index_cast %7 : i32 to index
    %c0_11 = arith.constant 0 : index
    %9 = vector.load %arg1[%8, %c0_11] : memref<8x4xf32, #tpu.memory_space<vmem>>, vector<8x4xf32>
    %10 = arith.truncf %9 : vector<8x4xf32> to vector<8x4xbf16>
    %cst = arith.constant dense<0.000000e+00> : vector<8x384xf32>
    %11 = tpu.matmul %10, %0, %cst {dimension_numbers = #tpu.dot_dimension_numbers<[1], [0], [0], [1], [0, 0, 1, 1], [], []>} : vector<8x4xbf16>, vector<4x384xbf16>, vector<8x384xf32> -> vector<8x384xf32>
    %12 = vector.broadcast %1 : vector<1x384xf32> to vector<8x384xf32>
    %13 = arith.addf %11, %12 : vector<8x384xf32>
    %14 = arith.truncf %13 : vector<8x384xf32> to vector<8x384xbf16>
    %15 = math.tanh %14 : vector<8x384xbf16>
    %cst_12 = arith.constant dense<0.000000e+00> : vector<8x384xf32>
    %16 = tpu.matmul %15, %2, %cst_12 {dimension_numbers = #tpu.dot_dimension_numbers<[1], [0], [0], [1], [0, 0, 1, 1], [], []>} : vector<8x384xbf16>, vector<384x384xbf16>, vector<8x384xf32> -> vector<8x384xf32>
    %17 = vector.broadcast %3 : vector<1x384xf32> to vector<8x384xf32>
    %18 = arith.addf %16, %17 : vector<8x384xf32>
    %19 = arith.truncf %18 : vector<8x384xf32> to vector<8x384xbf16>
    %20 = math.tanh %19 : vector<8x384xbf16>
    %21 = arith.extf %20 : vector<8x384xbf16> to vector<8x384xf32>
    %22 = vector.broadcast %4 : vector<1x384xf32> to vector<8x384xf32>
    %23 = arith.mulf %21, %22 : vector<8x384xf32>
    %cst_13 = arith.constant dense<0.000000e+00> : vector<8xf32>
    %24 = vector.multi_reduction <add>, %23, %cst_13 [1] : vector<8x384xf32> to vector<8xf32>
    %25 = vector.shape_cast %24 : vector<8xf32> to vector<8x1xf32>
    %26 = vector.broadcast %5 : vector<1x1xf32> to vector<8x1xf32>
    %27 = arith.addf %25, %26 : vector<8x1xf32>
    %28 = arith.index_cast %7 : i32 to index
    %c0_14 = arith.constant 0 : index
    %29 = vector.load %arg8[%28, %c0_14] : memref<8x1xf32, #tpu.memory_space<vmem>>, vector<8x1xf32>
    tpu.vector_store %arg8[%28, %c0_14], %27 {strides = array<i32>} : memref<8x1xf32, #tpu.memory_space<vmem>>, vector<8x1xf32>,
    %c1_i32 = arith.constant 1 : i32
    return
  }
  func.func @transform_0(%arg0: i32) -> (i32, i32) {
    %c0_i32 = arith.constant 0 : i32
    %c0_i32_0 = arith.constant 0 : i32
    return %arg0, %c0_i32 : i32, i32
  }
  func.func @transform_1(%arg0: i32) -> (i32, i32) {
    %c0_i32 = arith.constant 0 : i32
    %c0_i32_0 = arith.constant 0 : i32
    %c0_i32_1 = arith.constant 0 : i32
    return %c0_i32, %c0_i32_0 : i32, i32
  }
  func.func @transform_2(%arg0: i32) -> (i32, i32) {
    %c0_i32 = arith.constant 0 : i32
    %c0_i32_0 = arith.constant 0 : i32
    %c0_i32_1 = arith.constant 0 : i32
    return %c0_i32, %c0_i32_0 : i32, i32
  }
  func.func @transform_3(%arg0: i32) -> (i32, i32) {
    %c0_i32 = arith.constant 0 : i32
    %c0_i32_0 = arith.constant 0 : i32
    %c0_i32_1 = arith.constant 0 : i32
    return %c0_i32, %c0_i32_0 : i32, i32
  }
  func.func @transform_4(%arg0: i32) -> (i32, i32) {
    %c0_i32 = arith.constant 0 : i32
    %c0_i32_0 = arith.constant 0 : i32
    %c0_i32_1 = arith.constant 0 : i32
    return %c0_i32, %c0_i32_0 : i32, i32
  }
  func.func @transform_5(%arg0: i32) -> (i32, i32) {
    %c0_i32 = arith.constant 0 : i32
    %c0_i32_0 = arith.constant 0 : i32
    %c0_i32_1 = arith.constant 0 : i32
    return %c0_i32, %c0_i32_0 : i32, i32
  }
  func.func @transform_6(%arg0: i32) -> (i32, i32) {
    %c0_i32 = arith.constant 0 : i32
    %c0_i32_0 = arith.constant 0 : i32
    %c0_i32_1 = arith.constant 0 : i32
    return %c0_i32, %c0_i32_0 : i32, i32
  }
  func.func @transform_7(%arg0: i32) -> (i32, i32) {
    %c0_i32 = arith.constant 0 : i32
    %c0_i32_0 = arith.constant 0 : i32
    return %arg0, %c0_i32 : i32, i32
  }
}

</mosaic_0001>

<llo_original>
// kernel: kinetic_energy_net_forward.1
$region0: #{kinetic_energy_net_forward.1}
  #allocation0 [shape = 'u32[]', space=smem, size = 0x4, offset = 0x4, fixed_abs, tag = 'smem constant byte address 0x4 - core index']
  #allocation1 [shape = 'u32[72,128]{1,0:T(1,128)}', space=vmem, size = 0x9000, scoped, tag = 'internal scratch']
  #allocation2 [shape = 'f32[1,1]{1,0:T(1,128)S(1)}', space=vmem, size = 0x200, scoped, tag = 'scoped memory for kinetic_energy_net_forward.1']
  %s0 = inlined_call_operand.vmem [shape: f32[8,4], index: 0, kind: input, shape index: {}]
  %s1 = inlined_call_operand.vmem [shape: bf16[4,384], index: 1, kind: input, shape index: {}]
  %s2 = inlined_call_operand.vmem [shape: f32[1,384], index: 2, kind: input, shape index: {}]
  %s3 = inlined_call_operand.hbm [shape: bf16[384,384], index: 3, kind: input, shape index: {}]
  %s4 = inlined_call_operand.vmem [shape: f32[1,384], index: 4, kind: input, shape index: {}]
  %s5 = inlined_call_operand.vmem [shape: f32[1,384], index: 5, kind: input, shape index: {}]
  %s6 = inlined_call_operand.<no memory space> [shape: f32[1,1], index: 6, kind: input, shape index: {}]
  %s7 = inlined_call_operand.vmem [shape: f32[8,1], index: 7, kind: output, shape index: {}]
  %s8 = sld [smem:[#allocation0]]
  $region42: #{kinetic_energy_net_forward.1} parent=0
    _
  %s10 = ssub.s32 1, %s8
  %s11 = scalar_select 0, %s10, %s8
  %v12 = vstv %s6
  %13 = vst [vmem:[#allocation2] sm:$0x1] %v12
  $region1: #{kinetic_energy_net_forward.1} parent=0
    #allocation3 [shape = 'u8[294912]{0}', space=vmem, size = 0x48000, scoped, tag = 'input window, operand 3, single buffered']
    #allocation4 [shape = 's32[1]{0}', space=sflag, size = 0x4, scoped, tag = 'scoped memory for kinetic_energy_net_forward.1']
    %14 = vsyncpa [#allocation4], 0
    // Predicated region
    $region2: #{kinetic_energy_net_forward.1} parent=1 // pred_check
      _
    $region3: #{kinetic_energy_net_forward.1} parent=1 // pred_check_branch
      %16 = sbr.rel (0) target = $region5
    $region4: #{kinetic_energy_net_forward.1} parent=1 // pred_region
      _
    $region5: #{kinetic_energy_net_forward.1} parent=1 // pred_fallthru
      _
    // Predicated region
    $region6: #{kinetic_energy_net_forward.1} parent=1 // pred_check
      _
    $region7: #{kinetic_energy_net_forward.1} parent=1 // pred_check_branch
      %18 = sbr.rel (0) target = $region9
    $region8: #{kinetic_energy_net_forward.1} parent=1 // pred_region
      _
    $region9: #{kinetic_energy_net_forward.1} parent=1 // pred_fallthru
      _
    // Predicated region
    $region10: #{kinetic_energy_net_forward.1} parent=1 // pred_check
      _
    $region11: #{kinetic_energy_net_forward.1} parent=1 // pred_check_branch
      %20 = sbr.rel (0) target = $region13
    $region12: #{kinetic_energy_net_forward.1} parent=1 // pred_region
      _
    $region13: #{kinetic_energy_net_forward.1} parent=1 // pred_fallthru
      _
    // Predicated region
    $region14: #{kinetic_energy_net_forward.1} parent=1 // pred_check
      _
    $region15: #{kinetic_energy_net_forward.1} parent=1 // pred_check_branch
      %22 = sbr.rel (0) target = $region17
    $region16: #{kinetic_energy_net_forward.1} parent=1 // pred_region
      %24 = vsyncadd [#allocation4], 0
      %s25 = sshll.u32 %s3, 4
      %s26 = int_to_ptr.hbm [resolvable:$true] %s25
      %s27 = sshll.u32 [#allocation3], 4
      %s28 = int_to_ptr.vmem [resolvable:$true] %s27
      %33 = dma.hbm_to_vmem [thread:$0]  %s26, 9216, %s28, [#allocation4], 192, 192, 12
    $region17: #{kinetic_energy_net_forward.1} parent=1 // pred_fallthru
      _
    // Predicated region
    $region18: #{kinetic_energy_net_forward.1} parent=1 // pred_check
      _
    $region19: #{kinetic_energy_net_forward.1} parent=1 // pred_check_branch
      %35 = sbr.rel (0) target = $region21
    $region20: #{kinetic_energy_net_forward.1} parent=1 // pred_region
      _
    $region21: #{kinetic_energy_net_forward.1} parent=1 // pred_fallthru
      _
    // Predicated region
    $region22: #{kinetic_energy_net_forward.1} parent=1 // pred_check
      _
    $region23: #{kinetic_energy_net_forward.1} parent=1 // pred_check_branch
      %37 = sbr.rel (0) target = $region25
    $region24: #{kinetic_energy_net_forward.1} parent=1 // pred_region
      _
    $region25: #{kinetic_energy_net_forward.1} parent=1 // pred_fallthru
      _
    // Predicated region
    $region26: #{kinetic_energy_net_forward.1} parent=1 // pred_check
      _
    $region27: #{kinetic_energy_net_forward.1} parent=1 // pred_check_branch
      %39 = sbr.rel (0) target = $region29
    $region28: #{kinetic_energy_net_forward.1} parent=1 // pred_region
      _
    $region29: #{kinetic_energy_net_forward.1} parent=1 // pred_fallthru
      _
    // Predicated region
    $region30: #{kinetic_energy_net_forward.1} parent=1 // pred_check
      _
    $region31: #{kinetic_energy_net_forward.1} parent=1 // pred_check_branch
      %41 = sbr.rel (0) target = $region33
    $region32: #{kinetic_energy_net_forward.1} parent=1 // pred_region
      %43 = dma.done [#allocation4], 9216
    $region33: #{kinetic_energy_net_forward.1} parent=1 // pred_fallthru
      _
    %v45 = vld [vmem:[%s1] sm:$0x3f]
    %v46 = vld [vmem:[%s2] sm:$0x7]
    %v47 = vld [vmem:[#allocation3] sm:$0xff]
    %v48 = vld [vmem:[#allocation3 + $0x8] sm:$0xf]
    %v49 = vld [vmem:[#allocation3 + $0xc] sm:$0xff]
    %v50 = vld [vmem:[#allocation3 + $0x14] sm:$0xf]
    %v51 = vld [vmem:[#allocation3 + $0x18] sm:$0xff]
    %v52 = vld [vmem:[#allocation3 + $0x20] sm:$0xf]
    %v53 = vld [vmem:[#allocation3 + $0x24] sm:$0xff]
    %v54 = vld [vmem:[#allocation3 + $0x2c] sm:$0xf]
    %v55 = vld [vmem:[#allocation3 + $0x30] sm:$0xff]
    %v56 = vld [vmem:[#allocation3 + $0x38] sm:$0xf]
    %v57 = vld [vmem:[#allocation3 + $0x3c] sm:$0xff]
    %v58 = vld [vmem:[#allocation3 + $0x44] sm:$0xf]
    %v59 = vld [vmem:[#allocation3 + $0x48] sm:$0xff]
    %v60 = vld [vmem:[#allocation3 + $0x50] sm:$0xf]
    %v61 = vld [vmem:[#allocation3 + $0x54] sm:$0xff]
    %v62 = vld [vmem:[#allocation3 + $0x5c] sm:$0xf]
    %v63 = vld [vmem:[#allocation3 + $0x60] sm:$0xff]
    %v64 = vld [vmem:[#allocation3 + $0x68] sm:$0xf]
    %v65 = vld [vmem:[#allocation3 + $0x6c] sm:$0xff]
    %v66 = vld [vmem:[#allocation3 + $0x74] sm:$0xf]
    %v67 = vld [vmem:[#allocation3 + $0x78] sm:$0xff]
    %v68 = vld [vmem:[#allocation3 + $0x80] sm:$0xf]
    %v69 = vld [vmem:[#allocation3 + $0x84] sm:$0xff]
    %v70 = vld [vmem:[#allocation3 + $0x8c] sm:$0xf]
    %v71 = vld [vmem:[#allocation3 + $0x90] sm:$0xff]
    %v72 = vld [vmem:[#allocation3 + $0x98] sm:$0xf]
    %v73 = vld [vmem:[#allocation3 + $0x9c] sm:$0xff]
    %v74 = vld [vmem:[#allocation3 + $0xa4] sm:$0xf]
    %v75 = vld [vmem:[#allocation3 + $0xa8] sm:$0xff]
    %v76 = vld [vmem:[#allocation3 + $0xb0] sm:$0xf]
    %v77 = vld [vmem:[#allocation3 + $0xb4] sm:$0xff]
    %v78 = vld [vmem:[#allocation3 + $0xbc] sm:$0xf]
    %v79 = vld [vmem:[#allocation3 + $0xc0] sm:$0xff]
    %v80 = vld [vmem:[#allocation3 + $0xc8] sm:$0xf]
    %v81 = vld [vmem:[#allocation3 + $0xcc] sm:$0xff]
    %v82 = vld [vmem:[#allocation3 + $0xd4] sm:$0xf]
    %v83 = vld [vmem:[#allocation3 + $0xd8] sm:$0xff]
    %v84 = vld [vmem:[#allocation3 + $0xe0] sm:$0xf]
    %v85 = vld [vmem:[#allocation3 + $0xe4] sm:$0xff]
    %v86 = vld [vmem:[#allocation3 + $0xec] sm:$0xf]
    %v87 = vld [vmem:[#allocation3 + $0xf0] sm:$0xff]
    %v88 = vld [vmem:[#allocation3 + $0xf8] sm:$0xf]
    %v89 = vld [vmem:[#allocation3 + $0xfc] sm:$0xff]
    %v90 = vld [vmem:[#allocation3 + $0x104] sm:$0xf]
    %v91 = vld [vmem:[#allocation3 + $0x108] sm:$0xff]
    %v92 = vld [vmem:[#allocation3 + $0x110] sm:$0xf]
    %v93 = vld [vmem:[#allocation3 + $0x114] sm:$0xff]
    %v94 = vld [vmem:[#allocation3 + $0x11c] sm:$0xf]
    %v95 = vld [vmem:[#allocation3 + $0x120] sm:$0xff]
    %v96 = vld [vmem:[#allocation3 + $0x128] sm:$0xf]
    %v97 = vld [vmem:[#allocation3 + $0x12c] sm:$0xff]
    %v98 = vld [vmem:[#allocation3 + $0x134] sm:$0xf]
    %v99 = vld [vmem:[#allocation3 + $0x138] sm:$0xff]
    %v100 = vld [vmem:[#allocation3 + $0x140] sm:$0xf]
    %v101 = vld [vmem:[#allocation3 + $0x144] sm:$0xff]
    %v102 = vld [vmem:[#allocation3 + $0x14c] sm:$0xf]
    %v103 = vld [vmem:[#allocation3 + $0x150] sm:$0xff]
    %v104 = vld [vmem:[#allocation3 + $0x158] sm:$0xf]
    %v105 = vld [vmem:[#allocation3 + $0x15c] sm:$0xff]
    %v106 = vld [vmem:[#allocation3 + $0x164] sm:$0xf]
    %v107 = vld [vmem:[#allocation3 + $0x168] sm:$0xff]
    %v108 = vld [vmem:[#allocation3 + $0x170] sm:$0xf]
    %v109 = vld [vmem:[#allocation3 + $0x174] sm:$0xff]
    %v110 = vld [vmem:[#allocation3 + $0x17c] sm:$0xf]
    %v111 = vld [vmem:[#allocation3 + $0x180] sm:$0xff]
    %v112 = vld [vmem:[#allocation3 + $0x188] sm:$0xf]
    %v113 = vld [vmem:[#allocation3 + $0x18c] sm:$0xff]
    %v114 = vld [vmem:[#allocation3 + $0x194] sm:$0xf]
    %v115 = vld [vmem:[#allocation3 + $0x198] sm:$0xff]
    %v116 = vld [vmem:[#allocation3 + $0x1a0] sm:$0xf]
    %v117 = vld [vmem:[#allocation3 + $0x1a4] sm:$0xff]
    %v118 = vld [vmem:[#allocation3 + $0x1ac] sm:$0xf]
    %v119 = vld [vmem:[#allocation3 + $0x1b0] sm:$0xff]
    %v120 = vld [vmem:[#allocation3 + $0x1b8] sm:$0xf]
    %v121 = vld [vmem:[#allocation3 + $0x1bc] sm:$0xff]
    %v122 = vld [vmem:[#allocation3 + $0x1c4] sm:$0xf]
    %v123 = vld [vmem:[#allocation3 + $0x1c8] sm:$0xff]
    %v124 = vld [vmem:[#allocation3 + $0x1d0] sm:$0xf]
    %v125 = vld [vmem:[#allocation3 + $0x1d4] sm:$0xff]
    %v126 = vld [vmem:[#allocation3 + $0x1dc] sm:$0xf]
    %v127 = vld [vmem:[#allocation3 + $0x1e0] sm:$0xff]
    %v128 = vld [vmem:[#allocation3 + $0x1e8] sm:$0xf]
    %v129 = vld [vmem:[#allocation3 + $0x1ec] sm:$0xff]
    %v130 = vld [vmem:[#allocation3 + $0x1f4] sm:$0xf]
    %v131 = vld [vmem:[#allocation3 + $0x1f8] sm:$0xff]
    %v132 = vld [vmem:[#allocation3 + $0x200] sm:$0xf]
    %v133 = vld [vmem:[#allocation3 + $0x204] sm:$0xff]
    %v134 = vld [vmem:[#allocation3 + $0x20c] sm:$0xf]
    %v135 = vld [vmem:[#allocation3 + $0x210] sm:$0xff]
    %v136 = vld [vmem:[#allocation3 + $0x218] sm:$0xf]
    %v137 = vld [vmem:[#allocation3 + $0x21c] sm:$0xff]
    %v138 = vld [vmem:[#allocation3 + $0x224] sm:$0xf]
    %v139 = vld [vmem:[#allocation3 + $0x228] sm:$0xff]
    %v140 = vld [vmem:[#allocation3 + $0x230] sm:$0xf]
    %v141 = vld [vmem:[#allocation3 + $0x234] sm:$0xff]
    %v142 = vld [vmem:[#allocation3 + $0x23c] sm:$0xf]
    %v143 = vld [vmem:[%s4] sm:$0x7]
    %v144 = vld [vmem:[%s5] sm:$0x7]
    %v145 = vld [vmem:[#allocation2] sm:$0x1]
    %v146 = vld [vmem:[%s0] sm:$0xff]
    %v147 = vpack.c.bf16 %v146, %v146
    %v149 = vperm.slane %v46, 0
    %v150 = vperm.slane %v46, 1
    %v151 = vperm.slane %v46, 2
    %156 = vst [vmem:[#allocation1] ss:$4 sm:$0xff] %v45
    %v157 = vld.sshfl [vmem:[#allocation1] sm:$0xff pattern:$0x73625140]
    %v158 = vld.sshfl [vmem:[#allocation1 + $0x8] sm:$0xff pattern:$0x73625140]
    %v159 = vld.sshfl [vmem:[#allocation1 + $0x10] sm:$0xff pattern:$0x73625140]
    %vm160 = vcmask 31744
    %v162 = vsel %vm160, %v147, 0
    %vm164 = vcmask 1041408
    %v165 = vsel %vm164, %v157, 0
    %v167 = vsel %vm164, %v158, 0
    %v169 = vsel %vm164, %v159, 0
    %171 = vmatpush.bf16.msra.mxu0 0
    %172 = vmatpush.bf16.msra.mxu0 0
    %173 = vmatpush.bf16.msra.mxu0 0
    %174 = vmatpush.bf16.msra.mxu0 0
    %175 = vmatpush.bf16.msra.mxu0 0
    %176 = vmatpush.bf16.msra.mxu0 0
    %177 = vmatpush.bf16.msra.mxu0 0
    %178 = vmatpush.bf16.msra.mxu0 %v165
    %179 = vmatmul.bf16.gmra.mxu0 %v162
    %v180 = vpop.f32.mrf.mxu0
    %v181 = vadd.f32 %v149, %v180
    %v182 = vpop.f32.mrf.mxu0
    %183 = vdwg.mxu0
    %184 = vmatpush.bf16.msra.mxu0 0
    %185 = vmatpush.bf16.msra.mxu0 0
    %186 = vmatpush.bf16.msra.mxu0 0
    %187 = vmatpush.bf16.msra.mxu0 0
    %188 = vmatpush.bf16.msra.mxu0 0
    %189 = vmatpush.bf16.msra.mxu0 0
    %190 = vmatpush.bf16.msra.mxu0 0
    %191 = vmatpush.bf16.msra.mxu0 %v167
    %192 = vmatmul.bf16.gmra.mxu0 %v162
    %v193 = vpop.f32.mrf.mxu0
    %v194 = vadd.f32 %v150, %v193
    %v195 = vpop.f32.mrf.mxu0
    %196 = vdwg.mxu0
    %197 = vmatpush.bf16.msra.mxu0 0
    %198 = vmatpush.bf16.msra.mxu0 0
    %199 = vmatpush.bf16.msra.mxu0 0
    %200 = vmatpush.bf16.msra.mxu0 0
    %201 = vmatpush.bf16.msra.mxu0 0
    %202 = vmatpush.bf16.msra.mxu0 0
    %203 = vmatpush.bf16.msra.mxu0 0
    %204 = vmatpush.bf16.msra.mxu0 %v169
    %205 = vmatmul.bf16.gmra.mxu0 %v162
    %v206 = vpop.f32.mrf.mxu0
    %v207 = vadd.f32 %v151, %v206
    %v208 = vpop.f32.mrf.mxu0
    %209 = vdwg.mxu0
    %v210 = vpack.c.bf16 %v181, %v181
    %v211 = vpack.c.bf16 %v194, %v194
    %v212 = vpack.c.bf16 %v207, %v207
    %v213 = vunpack.c.l.bf16 %v210
    %v214 = vunpack.c.l.bf16 %v211
    %v215 = vunpack.c.l.bf16 %v212
    %v216 = vtanh.pop %v213
    %v217 = vtanh.pop %v214
    %v218 = vtanh.pop %v215
    %v219 = vpack.c.bf16 %v216, %v216
    %v220 = vpack.c.bf16 %v217, %v217
    %v221 = vpack.c.bf16 %v218, %v218
    %v223 = vperm.slane %v143, 0
    %v224 = vperm.slane %v143, 1
    %v225 = vperm.slane %v143, 2
    %v325 = vunpack.c.l.b16 %v47
    %v326 = vunpack.c.h.b16 %v47
    %v327 = vunpack.c.l.b16 %v48
    %v328 = vunpack.c.l.b16 %v49
    %v329 = vunpack.c.h.b16 %v49
    %v330 = vunpack.c.l.b16 %v50
    %v331 = vunpack.c.l.b16 %v51
    %v332 = vunpack.c.h.b16 %v51
    %v333 = vunpack.c.l.b16 %v52
    %v334 = vunpack.c.l.b16 %v53
    %v335 = vunpack.c.h.b16 %v53
    %v336 = vunpack.c.l.b16 %v54
    %v337 = vunpack.c.l.b16 %v55
    %v338 = vunpack.c.h.b16 %v55
    %v339 = vunpack.c.l.b16 %v56
    %v340 = vunpack.c.l.b16 %v57
    %v341 = vunpack.c.h.b16 %v57
    %v342 = vunpack.c.l.b16 %v58
    %v343 = vunpack.c.l.b16 %v59
    %v344 = vunpack.c.h.b16 %v59
    %v345 = vunpack.c.l.b16 %v60
    %v346 = vunpack.c.l.b16 %v61
    %v347 = vunpack.c.h.b16 %v61
    %v348 = vunpack.c.l.b16 %v62
    %v349 = vunpack.c.l.b16 %v63
    %v350 = vunpack.c.h.b16 %v63
    %v351 = vunpack.c.l.b16 %v64
    %v352 = vunpack.c.l.b16 %v65
    %v353 = vunpack.c.h.b16 %v65
    %v354 = vunpack.c.l.b16 %v66
    %v355 = vunpack.c.l.b16 %v67
    %v356 = vunpack.c.h.b16 %v67
    %v357 = vunpack.c.l.b16 %v68
    %v358 = vunpack.c.l.b16 %v69
    %v359 = vunpack.c.h.b16 %v69
    %v360 = vunpack.c.l.b16 %v70
    %v361 = vunpack.c.l.b16 %v71
    %v362 = vunpack.c.h.b16 %v71
    %v363 = vunpack.c.l.b16 %v72
    %v364 = vunpack.c.l.b16 %v73
    %v365 = vunpack.c.h.b16 %v73
    %v366 = vunpack.c.l.b16 %v74
    %v367 = vunpack.c.l.b16 %v75
    %v368 = vunpack.c.h.b16 %v75
    %v369 = vunpack.c.l.b16 %v76
    %v370 = vunpack.c.l.b16 %v77
    %v371 = vunpack.c.h.b16 %v77
    %v372 = vunpack.c.l.b16 %v78
    %v373 = vunpack.c.l.b16 %v79
    %v374 = vunpack.c.h.b16 %v79
    %v375 = vunpack.c.l.b16 %v80
    %v376 = vunpack.c.l.b16 %v81
    %v377 = vunpack.c.h.b16 %v81
    %v378 = vunpack.c.l.b16 %v82
    %v379 = vunpack.c.l.b16 %v83
    %v380 = vunpack.c.h.b16 %v83
    %v381 = vunpack.c.l.b16 %v84
    %v382 = vunpack.c.l.b16 %v85
    %v383 = vunpack.c.h.b16 %v85
    %v384 = vunpack.c.l.b16 %v86
    %v385 = vunpack.c.l.b16 %v87
    %v386 = vunpack.c.h.b16 %v87
    %v387 = vunpack.c.l.b16 %v88
    %v388 = vunpack.c.l.b16 %v89
    %v389 = vunpack.c.h.b16 %v89
    %v390 = vunpack.c.l.b16 %v90
    %v391 = vunpack.c.l.b16 %v91
    %v392 = vunpack.c.h.b16 %v91
    %v393 = vunpack.c.l.b16 %v92
    %v394 = vunpack.c.l.b16 %v93
    %v395 = vunpack.c.h.b16 %v93
    %v396 = vunpack.c.l.b16 %v94
    %v397 = vunpack.c.l.b16 %v95
    %v398 = vunpack.c.h.b16 %v95
    %v399 = vunpack.c.l.b16 %v96
    %v400 = vunpack.c.l.b16 %v97
    %v401 = vunpack.c.h.b16 %v97
    %v402 = vunpack.c.l.b16 %v98
    %v403 = vunpack.c.l.b16 %v99
    %v404 = vunpack.c.h.b16 %v99
    %v405 = vunpack.c.l.b16 %v100
    %v406 = vunpack.c.l.b16 %v101
    %v407 = vunpack.c.h.b16 %v101
    %v408 = vunpack.c.l.b16 %v102
    %v409 = vunpack.c.l.b16 %v103
    %v410 = vunpack.c.h.b16 %v103
    %v411 = vunpack.c.l.b16 %v104
    %v412 = vunpack.c.l.b16 %v105
    %v413 = vunpack.c.h.b16 %v105
    %v414 = vunpack.c.l.b16 %v106
    %v415 = vunpack.c.l.b16 %v107
    %v416 = vunpack.c.h.b16 %v107
    %v417 = vunpack.c.l.b16 %v108
    %v418 = vunpack.c.l.b16 %v109
    %v419 = vunpack.c.h.b16 %v109
    %v420 = vunpack.c.l.b16 %v110
    %v421 = vunpack.c.l.b16 %v111
    %v422 = vunpack.c.h.b16 %v111
    %v423 = vunpack.c.l.b16 %v112
    %v424 = vunpack.c.l.b16 %v113
    %v425 = vunpack.c.h.b16 %v113
    %v426 = vunpack.c.l.b16 %v114
    %v427 = vunpack.c.l.b16 %v115
    %v428 = vunpack.c.h.b16 %v115
    %v429 = vunpack.c.l.b16 %v116
    %v430 = vunpack.c.l.b16 %v117
    %v431 = vunpack.c.h.b16 %v117
    %v432 = vunpack.c.l.b16 %v118
    %v433 = vunpack.c.l.b16 %v119
    %v434 = vunpack.c.h.b16 %v119
    %v435 = vunpack.c.l.b16 %v120
    %v436 = vunpack.c.l.b16 %v121
    %v437 = vunpack.c.h.b16 %v121
    %v438 = vunpack.c.l.b16 %v122
    %v439 = vunpack.c.l.b16 %v123
    %v440 = vunpack.c.h.b16 %v123
    %v441 = vunpack.c.l.b16 %v124
    %v442 = vunpack.c.l.b16 %v125
    %v443 = vunpack.c.h.b16 %v125
    %v444 = vunpack.c.l.b16 %v126
    %v445 = vunpack.c.l.b16 %v127
    %v446 = vunpack.c.h.b16 %v127
    %v447 = vunpack.c.l.b16 %v128
    %v448 = vunpack.c.l.b16 %v129
    %v449 = vunpack.c.h.b16 %v129
    %v450 = vunpack.c.l.b16 %v130
    %v451 = vunpack.c.l.b16 %v131
    %v452 = vunpack.c.h.b16 %v131
    %v453 = vunpack.c.l.b16 %v132
    %v454 = vunpack.c.l.b16 %v133
    %v455 = vunpack.c.h.b16 %v133
    %v456 = vunpack.c.l.b16 %v134
    %v457 = vunpack.c.l.b16 %v135
    %v458 = vunpack.c.h.b16 %v135
    %v459 = vunpack.c.l.b16 %v136
    %v460 = vunpack.c.l.b16 %v137
    %v461 = vunpack.c.h.b16 %v137
    %v462 = vunpack.c.l.b16 %v138
    %v463 = vunpack.c.l.b16 %v139
    %v464 = vunpack.c.h.b16 %v139
    %v465 = vunpack.c.l.b16 %v140
    %v466 = vunpack.c.l.b16 %v141
    %v467 = vunpack.c.h.b16 %v141
    %v468 = vunpack.c.l.b16 %v142
    %v469 = vpack.c.b16 %v328, %v325
    %v470 = vpack.c.b16 %v329, %v326
    %v471 = vpack.c.b16 %v330, %v327
    %v472 = vpack.c.b16 %v334, %v331
    %v473 = vpack.c.b16 %v335, %v332
    %v474 = vpack.c.b16 %v336, %v333
    %v475 = vpack.c.b16 %v340, %v337
    %v476 = vpack.c.b16 %v341, %v338
    %v477 = vpack.c.b16 %v342, %v339
    %v478 = vpack.c.b16 %v346, %v343
    %v479 = vpack.c.b16 %v347, %v344
    %v480 = vpack.c.b16 %v348, %v345
    %v481 = vpack.c.b16 %v352, %v349
    %v482 = vpack.c.b16 %v353, %v350
    %v483 = vpack.c.b16 %v354, %v351
    %v484 = vpack.c.b16 %v358, %v355
    %v485 = vpack.c.b16 %v359, %v356
    %v486 = vpack.c.b16 %v360, %v357
    %v487 = vpack.c.b16 %v364, %v361
    %v488 = vpack.c.b16 %v365, %v362
    %v489 = vpack.c.b16 %v366, %v363
    %v490 = vpack.c.b16 %v370, %v367
    %v491 = vpack.c.b16 %v371, %v368
    %v492 = vpack.c.b16 %v372, %v369
    %v493 = vpack.c.b16 %v376, %v373
    %v494 = vpack.c.b16 %v377, %v374
    %v495 = vpack.c.b16 %v378, %v375
    %v496 = vpack.c.b16 %v382, %v379
    %v497 = vpack.c.b16 %v383, %v380
    %v498 = vpack.c.b16 %v384, %v381
    %v499 = vpack.c.b16 %v388, %v385
    %v500 = vpack.c.b16 %v389, %v386
    %v501 = vpack.c.b16 %v390, %v387
    %v502 = vpack.c.b16 %v394, %v391
    %v503 = vpack.c.b16 %v395, %v392
    %v504 = vpack.c.b16 %v396, %v393
    %v505 = vpack.c.b16 %v400, %v397
    %v506 = vpack.c.b16 %v401, %v398
    %v507 = vpack.c.b16 %v402, %v399
    %v508 = vpack.c.b16 %v406, %v403
    %v509 = vpack.c.b16 %v407, %v404
    %v510 = vpack.c.b16 %v408, %v405
    %v511 = vpack.c.b16 %v412, %v409
    %v512 = vpack.c.b16 %v413, %v410
    %v513 = vpack.c.b16 %v414, %v411
    %v514 = vpack.c.b16 %v418, %v415
    %v515 = vpack.c.b16 %v419, %v416
    %v516 = vpack.c.b16 %v420, %v417
    %v517 = vpack.c.b16 %v424, %v421
    %v518 = vpack.c.b16 %v425, %v422
    %v519 = vpack.c.b16 %v426, %v423
    %v520 = vpack.c.b16 %v430, %v427
    %v521 = vpack.c.b16 %v431, %v428
    %v522 = vpack.c.b16 %v432, %v429
    %v523 = vpack.c.b16 %v436, %v433
    %v524 = vpack.c.b16 %v437, %v434
    %v525 = vpack.c.b16 %v438, %v435
    %v526 = vpack.c.b16 %v442, %v439
    %v527 = vpack.c.b16 %v443, %v440
    %v528 = vpack.c.b16 %v444, %v441
    %v529 = vpack.c.b16 %v448, %v445
    %v530 = vpack.c.b16 %v449, %v446
    %v531 = vpack.c.b16 %v450, %v447
    %v532 = vpack.c.b16 %v454, %v451
    %v533 = vpack.c.b16 %v455, %v452
    %v534 = vpack.c.b16 %v456, %v453
    %v535 = vpack.c.b16 %v460, %v457
    %v536 = vpack.c.b16 %v461, %v458
    %v537 = vpack.c.b16 %v462, %v459
    %v538 = vpack.c.b16 %v466, %v463
    %v539 = vpack.c.b16 %v467, %v464
    %v540 = vpack.c.b16 %v468, %v465
    %613 = vmatpush.bf16.msra.mxu0 %v490
    %614 = vmatpush.bf16.msra.mxu0 %v487
    %615 = vmatpush.bf16.msra.mxu0 %v484
    %616 = vmatpush.bf16.msra.mxu0 %v481
    %617 = vmatpush.bf16.msra.mxu0 %v478
    %618 = vmatpush.bf16.msra.mxu0 %v475
    %619 = vmatpush.bf16.msra.mxu0 %v472
    %620 = vmatpush.bf16.msra.mxu0 %v469
    %621 = vmatmul.bf16.gmra.mxu0 %v219
    %v622 = vpop.f32.mrf.mxu0
    %v623 = vadd.f32 %v223, %v622
    %v624 = vpop.f32.mrf.mxu0
    %625 = vdwg.mxu0
    %626 = vmatpush.bf16.msra.mxu0 %v514
    %627 = vmatpush.bf16.msra.mxu0 %v511
    %628 = vmatpush.bf16.msra.mxu0 %v508
    %629 = vmatpush.bf16.msra.mxu0 %v505
    %630 = vmatpush.bf16.msra.mxu0 %v502
    %631 = vmatpush.bf16.msra.mxu0 %v499
    %632 = vmatpush.bf16.msra.mxu0 %v496
    %633 = vmatpush.bf16.msra.mxu0 %v493
    %634 = vmatmul.bf16.gmra.mxu0 %v220
    %v635 = vpop.f32.mrf.mxu0
    %v636 = vadd.f32 %v623, %v635
    %v637 = vpop.f32.mrf.mxu0
    %638 = vdwg.mxu0
    %639 = vmatpush.bf16.msra.mxu0 %v538
    %640 = vmatpush.bf16.msra.mxu0 %v535
    %641 = vmatpush.bf16.msra.mxu0 %v532
    %642 = vmatpush.bf16.msra.mxu0 %v529
    %643 = vmatpush.bf16.msra.mxu0 %v526
    %644 = vmatpush.bf16.msra.mxu0 %v523
    %645 = vmatpush.bf16.msra.mxu0 %v520
    %646 = vmatpush.bf16.msra.mxu0 %v517
    %647 = vmatmul.bf16.gmra.mxu0 %v221
    %v648 = vpop.f32.mrf.mxu0
    %v649 = vadd.f32 %v636, %v648
    %v650 = vpop.f32.mrf.mxu0
    %651 = vdwg.mxu0
    %652 = vmatpush.bf16.msra.mxu0 %v491
    %653 = vmatpush.bf16.msra.mxu0 %v488
    %654 = vmatpush.bf16.msra.mxu0 %v485
    %655 = vmatpush.bf16.msra.mxu0 %v482
    %656 = vmatpush.bf16.msra.mxu0 %v479
    %657 = vmatpush.bf16.msra.mxu0 %v476
    %658 = vmatpush.bf16.msra.mxu0 %v473
    %659 = vmatpush.bf16.msra.mxu0 %v470
    %660 = vmatmul.bf16.gmra.mxu0 %v219
    %v661 = vpop.f32.mrf.mxu0
    %v662 = vadd.f32 %v224, %v661
    %v663 = vpop.f32.mrf.mxu0
    %664 = vdwg.mxu0
    %665 = vmatpush.bf16.msra.mxu0 %v515
    %666 = vmatpush.bf16.msra.mxu0 %v512
    %667 = vmatpush.bf16.msra.mxu0 %v509
    %668 = vmatpush.bf16.msra.mxu0 %v506
    %669 = vmatpush.bf16.msra.mxu0 %v503
    %670 = vmatpush.bf16.msra.mxu0 %v500
    %671 = vmatpush.bf16.msra.mxu0 %v497
    %672 = vmatpush.bf16.msra.mxu0 %v494
    %673 = vmatmul.bf16.gmra.mxu0 %v220
    %v674 = vpop.f32.mrf.mxu0
    %v675 = vadd.f32 %v662, %v674
    %v676 = vpop.f32.mrf.mxu0
    %677 = vdwg.mxu0
    %678 = vmatpush.bf16.msra.mxu0 %v539
    %679 = vmatpush.bf16.msra.mxu0 %v536
    %680 = vmatpush.bf16.msra.mxu0 %v533
    %681 = vmatpush.bf16.msra.mxu0 %v530
    %682 = vmatpush.bf16.msra.mxu0 %v527
    %683 = vmatpush.bf16.msra.mxu0 %v524
    %684 = vmatpush.bf16.msra.mxu0 %v521
    %685 = vmatpush.bf16.msra.mxu0 %v518
    %686 = vmatmul.bf16.gmra.mxu0 %v221
    %v687 = vpop.f32.mrf.mxu0
    %v688 = vadd.f32 %v675, %v687
    %v689 = vpop.f32.mrf.mxu0
    %690 = vdwg.mxu0
    %691 = vmatpush.bf16.msra.mxu0 %v492
    %692 = vmatpush.bf16.msra.mxu0 %v489
    %693 = vmatpush.bf16.msra.mxu0 %v486
    %694 = vmatpush.bf16.msra.mxu0 %v483
    %695 = vmatpush.bf16.msra.mxu0 %v480
    %696 = vmatpush.bf16.msra.mxu0 %v477
    %697 = vmatpush.bf16.msra.mxu0 %v474
    %698 = vmatpush.bf16.msra.mxu0 %v471
    %699 = vmatmul.bf16.gmra.mxu0 %v219
    %v700 = vpop.f32.mrf.mxu0
    %v701 = vadd.f32 %v225, %v700
    %v702 = vpop.f32.mrf.mxu0
    %703 = vdwg.mxu0
    %704 = vmatpush.bf16.msra.mxu0 %v516
    %705 = vmatpush.bf16.msra.mxu0 %v513
    %706 = vmatpush.bf16.msra.mxu0 %v510
    %707 = vmatpush.bf16.msra.mxu0 %v507
    %708 = vmatpush.bf16.msra.mxu0 %v504
    %709 = vmatpush.bf16.msra.mxu0 %v501
    %710 = vmatpush.bf16.msra.mxu0 %v498
    %711 = vmatpush.bf16.msra.mxu0 %v495
    %712 = vmatmul.bf16.gmra.mxu0 %v220
    %v713 = vpop.f32.mrf.mxu0
    %v714 = vadd.f32 %v701, %v713
    %v715 = vpop.f32.mrf.mxu0
    %716 = vdwg.mxu0
    %717 = vmatpush.bf16.msra.mxu0 %v540
    %718 = vmatpush.bf16.msra.mxu0 %v537
    %719 = vmatpush.bf16.msra.mxu0 %v534
    %720 = vmatpush.bf16.msra.mxu0 %v531
    %721 = vmatpush.bf16.msra.mxu0 %v528
    %722 = vmatpush.bf16.msra.mxu0 %v525
    %723 = vmatpush.bf16.msra.mxu0 %v522
    %724 = vmatpush.bf16.msra.mxu0 %v519
    %725 = vmatmul.bf16.gmra.mxu0 %v221
    %v726 = vpop.f32.mrf.mxu0
    %v727 = vadd.f32 %v714, %v726
    %v728 = vpop.f32.mrf.mxu0
    %729 = vdwg.mxu0
    %v730 = vpack.c.bf16 %v688, %v649
    %v731 = vpack.c.bf16 %v727, %v727
    %v732 = vunpack.c.l.bf16 %v730
    %v733 = vunpack.c.h.bf16 %v730
    %v734 = vunpack.c.l.bf16 %v731
    %v735 = vtanh.pop %v732
    %v736 = vtanh.pop %v733
    %v737 = vtanh.pop %v734
    %v738 = vpack.c.bf16 %v736, %v735
    %v739 = vpack.c.bf16 %v737, %v737
    %v740 = vunpack.c.l.bf16 %v738
    %v741 = vunpack.c.h.bf16 %v738
    %v742 = vunpack.c.l.bf16 %v739
    %v744 = vperm.slane %v144, 0
    %v745 = vperm.slane %v144, 1
    %v746 = vperm.slane %v144, 2
    %v750 = vmul.f32 %v740, %v744
    %v751 = vmul.f32 %v741, %v745
    %v752 = vmul.f32 %v742, %v746
    %v753 = vadd.f32 %v750, %v751
    %v754 = vadd.f32 %v753, %v752
    %755 = vadd.xlane.f32.xlu0 %v754
    %v756 = vpop.xlane.xlu0 %755
    %v758 = vperm.slane %v145, 0
    %v760 = vadd.f32 %v756, %v758
    %vm761 = vcmask 7168
    %762 = vst.msk [vmem:[%s7] sm:$0xff] %vm761, %v760
    // Predicated region
    $region34: #{kinetic_energy_net_forward.1} parent=1 // pred_check
      _
    $region35: #{kinetic_energy_net_forward.1} parent=1 // pred_check_branch
      %764 = sbr.rel (0) target = $region37
    $region36: #{kinetic_energy_net_forward.1} parent=1 // pred_region
      _
    $region37: #{kinetic_energy_net_forward.1} parent=1 // pred_fallthru
      _
    // Predicated region
    $region38: #{kinetic_energy_net_forward.1} parent=1 // pred_check
      _
    $region39: #{kinetic_energy_net_forward.1} parent=1 // pred_check_branch
      %766 = sbr.rel (0) target = $region41
    $region40: #{kinetic_energy_net_forward.1} parent=1 // pred_region
      _
    $region41: #{kinetic_energy_net_forward.1} parent=1 // pred_fallthru
      _
    %767 = vsyncpa [#allocation4], 1

</llo_original>
